<compile_context>
chip_gen: v7x
topology: tpu7x:2x2x1
jax: 0.10.0
libtpu: 0.0.40
codegen_flags: <defaults>
</compile_context>

<pallas_src>
from typing import NamedTuple

import jax
import jax.numpy as jnp
from jax.experimental import pallas as pl
from jax.experimental.pallas import tpu as pltpu


def _round_up(x: int, m: int) -> int:
    return (x + m - 1) // m * m


def _vmem_bytes(tm: int, tn: int, tk: int, in_itemsize: int, out_itemsize: int) -> int:
    # Double-buffered inputs + double-buffered output + f32 accumulator (worst case).
    x_b = tm * tk * in_itemsize
    w_b = tk * tn * in_itemsize
    b_b = tn * 4
    o_b = tm * tn * out_itemsize
    acc_b = tm * tn * 4
    return 2 * (x_b + w_b + b_b) + 2 * o_b + acc_b


# ----------------------------- kernels ---------------------------------------


def _ff_fused_kernel(x_ref, w_ref, b_ref, o_ref):
    # K fully resident in the tile: single MXU pass, fused bias + sigmoid epilogue.
    acc = jnp.dot(x_ref[...], w_ref[...], preferred_element_type=jnp.float32)
    o_ref[...] = jax.nn.sigmoid(acc + b_ref[...]).astype(o_ref.dtype)


def _ff_ktiled_kernel(x_ref, w_ref, b_ref, o_ref, acc_ref):
    # Fallback when K does not fit VMEM: resident f32 accumulator over the K axis.
    k = pl.program_id(2)

    @pl.when(k == 0)
    def _init():
        acc_ref[...] = jnp.zeros_like(acc_ref)

    acc_ref[...] += jnp.dot(x_ref[...], w_ref[...], preferred_element_type=jnp.float32)

    @pl.when(k == pl.num_programs(2) - 1)
    def _finalize():
        o_ref[...] = jax.nn.sigmoid(acc_ref[...] + b_ref[...]).astype(o_ref.dtype)


# ------------------------ one-time parameter prep ----------------------------


class FeedForwardParams(NamedTuple):
    w_t: jax.Array        # (Kp, Np): weight transposed to (in, out), zero-padded
    b: jax.Array          # (1, Np): bias, f32, zero-padded
    tn: int
    tk: int
    in_features: int
    out_features: int


def prepare_feedforward_params(weight, bias, *,
                               compute_dtype=None,
                               tn_max: int = 512,
                               tk_max: int = 2048,
                               tm_hint: int = 512,
                               vmem_budget_bytes: int = 40 * 1024 * 1024):
    """One-time (model-load) transform of PyTorch nn.Linear params.

    weight: (out_features, in_features)  ->  (Kp, Np) transposed + zero-padded.
    bias:   (out_features,)              ->  (1, Np) f32.
    Optionally stores the weight in `compute_dtype` (e.g. bf16) to halve its HBM
    stream and hit the native bf16 MXU rate; the kernel keeps f32 accumulation.
    """
    out_features, in_features = weight.shape
    assert bias.shape == (out_features,)

    dtype = jnp.dtype(compute_dtype) if compute_dtype is not None else jnp.dtype(weight.dtype)
    in_itemsize = dtype.itemsize
    out_itemsize = jnp.dtype(weight.dtype).itemsize

    tn = min(tn_max, _round_up(out_features, 128))
    tk = min(tk_max, _round_up(in_features, 128))

    # Prefer K fully resident (drops the K grid axis and all accumulator VMEM
    # round-trips) whenever the tile buffers fit the VMEM budget.
    kp_full = _round_up(in_features, 128)
    if _vmem_bytes(tm_hint, tn, kp_full, in_itemsize, out_itemsize) <= vmem_budget_bytes:
        tk = kp_full

    kp = _round_up(in_features, tk)
    np_ = _round_up(out_features, tn)

    w_t = weight.astype(dtype).T                                   # (K, N)
    if (kp, np_) != (in_features, out_features):
        w_t = jnp.pad(w_t, ((0, kp - in_features), (0, np_ - out_features)))

    b = bias.astype(jnp.float32)
    if np_ != out_features:
        b = jnp.pad(b, (0, np_ - out_features))
    b = b.reshape(1, np_)

    return FeedForwardParams(w_t=w_t, b=b, tn=tn, tk=tk,
                             in_features=in_features, out_features=out_features)


# ------------------------------- hot path ------------------------------------


def feedforward(x, params: FeedForwardParams, *,
                tm_max: int = 512,
                vmem_limit_bytes: int = 48 * 1024 * 1024):
    """sigmoid(x @ W.T + b) with pre-prepared (transposed/padded) params.

    vmem_limit_bytes defaults to 48 MiB (safe on v7x's 64 MiB VMEM); it can be
    raised toward 64–100 MiB on v5e/v6e along with larger tm_max/tk_max.
    On v7x, keep M/tm * N/tn >= 2 so both TensorCores get work.
    """
    M, K = x.shape
    assert K == params.in_features
    N = params.out_features
    Kp, Np = params.w_t.shape
    tn, tk = params.tn, params.tk

    out_dtype = x.dtype

    # Small-M regime: whole batch in one block -> weight streamed exactly once.
    tm = min(tm_max, _round_up(M, 8))
    Mp = _round_up(M, tm)

    # Cast x to the weight's compute dtype once at the source (halves x DMA for
    # bf16), then zero-pad M/K to the tile grid (padded K contributes exact 0).
    x_c = x.astype(params.w_t.dtype)
    if (Mp, Kp) != (M, K):
        x_c = jnp.pad(x_c, ((0, Mp - M), (0, Kp - K)))

    n_i, n_j, n_k = Mp // tm, Np // tn, Kp // tk

    cost = pl.CostEstimate(
        flops=2 * M * N * K,
        transcendentals=M * N,
        bytes_accessed=(x_c.size * x_c.dtype.itemsize
                        + params.w_t.size * params.w_t.dtype.itemsize
                        + params.b.size * 4
                        + Mp * Np * jnp.dtype(out_dtype).itemsize),
    )

    if n_k == 1:
        # Fused path: no K grid axis, no accumulator scratch.
        grid_spec = pltpu.PrefetchScalarGridSpec(
            num_scalar_prefetch=0,
            grid=(n_i, n_j),
            in_specs=[
                pl.BlockSpec((tm, tk), lambda i, j: (i, 0)),   # x tile
                pl.BlockSpec((tk, tn), lambda i, j: (0, j)),   # W (K, N) tile
                pl.BlockSpec((1, tn), lambda i, j: (0, j)),    # bias tile
            ],
            out_specs=pl.BlockSpec((tm, tn), lambda i, j: (i, j)),
        )
        kernel = _ff_fused_kernel
        semantics = ("parallel", "parallel")
    else:
        grid_spec = pltpu.PrefetchScalarGridSpec(
            num_scalar_prefetch=0,
            grid=(n_i, n_j, n_k),
            in_specs=[
                pl.BlockSpec((tm, tk), lambda i, j, k: (i, k)),
                pl.BlockSpec((tk, tn), lambda i, j, k: (k, j)),
                pl.BlockSpec((1, tn), lambda i, j, k: (0, j)),
            ],
            out_specs=pl.BlockSpec((tm, tn), lambda i, j, k: (i, j)),
            scratch_shapes=[pltpu.VMEM((tm, tn), jnp.float32)],
        )
        kernel = _ff_ktiled_kernel
        semantics = ("parallel", "parallel", "arbitrary")

    out_p = pl.pallas_call(
        kernel,
        out_shape=jax.ShapeDtypeStruct((Mp, Np), out_dtype),
        grid_spec=grid_spec,
        compiler_params=pltpu.CompilerParams(
            dimension_semantics=semantics,
            vmem_limit_bytes=vmem_limit_bytes,
        ),
        cost_estimate=cost,
    )(x_c, params.w_t, params.b)

    return out_p[:M, :N]


def feedforward_from_torch_layout(x, weight, bias, *, compute_dtype=None, **kwargs):
    """Convenience: accepts PyTorch-layout weight. Prefer preparing params once."""
    params = prepare_feedforward_params(weight, bias, compute_dtype=compute_dtype)
    return feedforward(x, params, **kwargs)


# --------------------------------- tests -------------------------------------


if __name__ == "__main__":
    key = jax.random.PRNGKey(0)
    ks = jax.random.split(key, 6)

    # 1) Toy shape implied by the module (f32, tight tolerance, fused path).
    batch, in_features, out_features = 8, 32, 64
    bound = 1.0 / (in_features ** 0.5)
    x = jax.random.normal(ks[0], (batch, in_features), dtype=jnp.float32)
    w = jax.random.uniform(ks[1], (out_features, in_features),
                           minval=-bound, maxval=bound, dtype=jnp.float32)
    b = jax.random.uniform(ks[2], (out_features,),
                           minval=-bound, maxval=bound, dtype=jnp.float32)

    params = prepare_feedforward_params(w, b)     # one-time, outside the hot path
    out = jax.block_until_ready(feedforward(x, params))
    ref = jax.nn.sigmoid(x @ w.T + b)
    assert out.shape == (batch, out_features)
    assert jnp.allclose(out, ref, atol=1e-5, rtol=1e-5)

    # 2) Larger shape: multi-block on M/N, K fully resident -> fused kernel.
    M2, K2, N2 = 384, 640, 320
    bound2 = 1.0 / (K2 ** 0.5)
    x2 = jax.random.normal(ks[3], (M2, K2), dtype=jnp.float32)
    w2 = jax.random.uniform(ks[4], (N2, K2), minval=-bound2, maxval=bound2,
                            dtype=jnp.float32)
    b2 = jax.random.uniform(ks[5], (N2,), minval=-bound2, maxval=bound2,
                            dtype=jnp.float32)
    ref2 = jax.nn.sigmoid(x2 @ w2.T + b2)

    params2 = prepare_feedforward_params(w2, b2)
    out2 = jax.block_until_ready(feedforward(x2, params2))
    assert out2.shape == (M2, N2)
    assert jnp.allclose(out2, ref2, atol=1e-3, rtol=1e-3)

    # 3) Force the K-tiled accumulator path (small tk ceiling + tiny VMEM budget).
    params3 = prepare_feedforward_params(w2, b2, tk_max=256,
                                         vmem_budget_bytes=1 * 1024 * 1024)
    out3 = jax.block_until_ready(feedforward(x2, params3))
    assert jnp.allclose(out3, ref2, atol=1e-3, rtol=1e-3)

    # 4) bf16 operands cast at the source (halved HBM traffic, f32 accumulation).
    params4 = prepare_feedforward_params(w2, b2, compute_dtype=jnp.bfloat16)
    out4 = jax.block_until_ready(feedforward(x2, params4))
    assert out4.dtype == x2.dtype
    assert jnp.allclose(out4, ref2, atol=2e-2, rtol=2e-2)

    print("KERNEL_OK")
</pallas_src>

<mosaic_0001>
module attributes {stable_mosaic.version = 11 : i64} {
  func.func @_ff_fused_kernel(%arg0: i32, %arg1: i32, %arg2: memref<8x128xf32, #tpu.memory_space<vmem>>, %arg3: memref<128x128xf32, #tpu.memory_space<vmem>>, %arg4: memref<1x128xf32, #tpu.memory_space<vmem>>, %arg5: memref<8x128xf32, #tpu.memory_space<vmem>>) attributes {dimension_semantics = [#tpu.dimension_semantics<parallel>, #tpu.dimension_semantics<parallel>], iteration_bounds = array<i64: 1, 1>, scalar_prefetch = 0 : i64, scratch_operands = 0 : i64, tpu.core_type = #tpu.core_type<tc>, window_params = [{transform_indices = @transform_0, window_bounds = array<i64: 8, 128>}, {transform_indices = @transform_1, window_bounds = array<i64: 128, 128>}, {transform_indices = @transform_2, window_bounds = array<i64: 1, 128>}, {transform_indices = @transform_3, window_bounds = array<i64: 8, 128>}]} {
    %c0 = arith.constant 0 : index
    %c0_0 = arith.constant 0 : index
    %0 = vector.load %arg2[%c0, %c0_0] : memref<8x128xf32, #tpu.memory_space<vmem>>, vector<8x128xf32>
    %c0_1 = arith.constant 0 : index
    %c0_2 = arith.constant 0 : index
    %1 = vector.load %arg3[%c0_1, %c0_2] : memref<128x128xf32, #tpu.memory_space<vmem>>, vector<128x128xf32>
    %cst = arith.constant dense<0.000000e+00> : vector<8x128xf32>
    %2 = tpu.matmul %0, %1, %cst {dimension_numbers = #tpu.dot_dimension_numbers<[1], [0], [0], [1], [0, 0, 1, 1], [], []>} : vector<8x128xf32>, vector<128x128xf32>, vector<8x128xf32> -> vector<8x128xf32>
    %c0_3 = arith.constant 0 : index
    %c0_4 = arith.constant 0 : index
    %3 = vector.load %arg4[%c0_3, %c0_4] : memref<1x128xf32, #tpu.memory_space<vmem>>, vector<1x128xf32>
    %4 = vector.broadcast %3 : vector<1x128xf32> to vector<8x128xf32>
    %5 = arith.addf %2, %4 : vector<8x128xf32>
    %6 = arith.negf %5 : vector<8x128xf32>
    %7 = math.exp %6 : vector<8x128xf32>
    %cst_5 = arith.constant 1.000000e+00 : f32
    %8 = vector.broadcast %cst_5 : f32 to vector<8x128xf32>
    %9 = arith.addf %8, %7 : vector<8x128xf32>
    %10 = arith.divf %8, %9 : vector<8x128xf32>
    %c0_6 = arith.constant 0 : index
    %c0_7 = arith.constant 0 : index
    %11 = vector.load %arg5[%c0_6, %c0_7] : memref<8x128xf32, #tpu.memory_space<vmem>>, vector<8x128xf32>
    tpu.vector_store %arg5[%c0_6, %c0_7], %10 {strides = array<i32>} : memref<8x128xf32, #tpu.memory_space<vmem>>, vector<8x128xf32>,
    return
  }
  func.func @transform_0(%arg0: i32, %arg1: i32) -> (i32, i32) {
    %c0_i32 = arith.constant 0 : i32
    %c0_i32_0 = arith.constant 0 : i32
    return %arg0, %c0_i32 : i32, i32
  }
  func.func @transform_1(%arg0: i32, %arg1: i32) -> (i32, i32) {
    %c0_i32 = arith.constant 0 : i32
    %c0_i32_0 = arith.constant 0 : i32
    return %c0_i32, %arg1 : i32, i32
  }
  func.func @transform_2(%arg0: i32, %arg1: i32) -> (i32, i32) {
    %c0_i32 = arith.constant 0 : i32
    %c0_i32_0 = arith.constant 0 : i32
    return %c0_i32, %arg1 : i32, i32
  }
  func.func @transform_3(%arg0: i32, %arg1: i32) -> (i32, i32) {
    %c0_i32 = arith.constant 0 : i32
    return %arg0, %arg1 : i32, i32
  }
}

</mosaic_0001>

<llo_original>
// kernel: tpu_custom_call.1
$region0: #{tpu_custom_call.1}
  #allocation0 [shape = 'u32[]', space=smem, size = 0x4, offset = 0x4, fixed_abs, tag = 'smem constant byte address 0x4 - core index']
  #allocation1 [shape = 'u32[144,128]{1,0:T(1,128)}', space=vmem, size = 0x12000, scoped, tag = 'internal scratch']
  %s0 = inlined_call_operand.hbm [shape: f32[8,128], index: 0, kind: input, shape index: {}]
  %s1 = inlined_call_operand.hbm [shape: f32[128,128], index: 1, kind: input, shape index: {}]
  %s2 = inlined_call_operand.vmem [shape: f32[1,128], index: 2, kind: input, shape index: {}]
  %s3 = inlined_call_operand.hbm [shape: f32[8,128], index: 3, kind: output, shape index: {}]
  %s4 = sld [smem:[#allocation0]]
  $region30: #{tpu_custom_call.1} parent=0
    _
  %s6 = ssub.s32 1, %s4
  %s7 = scalar_select 0, %s6, %s4
  $region1: #{tpu_custom_call.1} parent=0
    #allocation2 [shape = 'u8[4096]{0}', space=vmem, size = 0x1000, scoped, tag = 'input window, operand 0, single buffered']
    #allocation3 [shape = 's32[1]{0}', space=sflag, size = 0x4, scoped, tag = 'scoped memory for tpu_custom_call.1']
    #allocation4 [shape = 's32[1]{0}', space=sflag, size = 0x4, scoped, tag = 'scoped memory for tpu_custom_call.1']
    #allocation5 [shape = 'u8[65536]{0}', space=vmem, size = 0x10000, scoped, tag = 'input window, operand 1, single buffered']
    #allocation6 [shape = 's32[1]{0}', space=sflag, size = 0x4, scoped, tag = 'scoped memory for tpu_custom_call.1']
    #allocation7 [shape = 'u8[4096]{0}', space=vmem, size = 0x1000, scoped, tag = 'output window, operand 0, single buffered']
    %8 = vsyncpa [#allocation3], 0
    %9 = vsyncpa [#allocation6], 0
    %10 = vsyncpa [#allocation4], 0
    // Predicated region
    $region2: #{tpu_custom_call.1} parent=1 // pred_check
      _
    $region3: #{tpu_custom_call.1} parent=1 // pred_check_branch
      %12 = sbr.rel (0) target = $region5
    $region4: #{tpu_custom_call.1} parent=1 // pred_region
      %s14 = ssub.s32 128, 128
      %15 = vsyncadd [#allocation3], %s14
      %s17 = sshll.u32 [#allocation2], 4
      %s18 = int_to_ptr.vmem [resolvable:$true] %s17
      %20 = dma.hbm_to_vmem [thread:$0]  %s0, 128, %s18, [#allocation3]
    $region5: #{tpu_custom_call.1} parent=1 // pred_fallthru
      _
    // Predicated region
    $region6: #{tpu_custom_call.1} parent=1 // pred_check
      _
    $region7: #{tpu_custom_call.1} parent=1 // pred_check_branch
      %22 = sbr.rel (0) target = $region9
    $region8: #{tpu_custom_call.1} parent=1 // pred_region
      %s24 = ssub.s32 2048, 2048
      %25 = vsyncadd [#allocation6], %s24
      %s26 = sshll.u32 [#allocation5], 4
      %s27 = int_to_ptr.vmem [resolvable:$true] %s26
      %32 = dma.hbm_to_vmem [thread:$0]  %s1, 2048, %s27, [#allocation6], 128, 128, 8
    $region9: #{tpu_custom_call.1} parent=1 // pred_fallthru
      _
    // Predicated region
    $region10: #{tpu_custom_call.1} parent=1 // pred_check
      _
    $region11: #{tpu_custom_call.1} parent=1 // pred_check_branch
      %34 = sbr.rel (0) target = $region13
    $region12: #{tpu_custom_call.1} parent=1 // pred_region
      _
    $region13: #{tpu_custom_call.1} parent=1 // pred_fallthru
      _
    // Predicated region
    $region14: #{tpu_custom_call.1} parent=1 // pred_check
      _
    $region15: #{tpu_custom_call.1} parent=1 // pred_check_branch
      %36 = sbr.rel (0) target = $region17
    $region16: #{tpu_custom_call.1} parent=1 // pred_region
      %37 = dma.done [#allocation3], 128
    $region17: #{tpu_custom_call.1} parent=1 // pred_fallthru
      _
    // Predicated region
    $region18: #{tpu_custom_call.1} parent=1 // pred_check
      _
    $region19: #{tpu_custom_call.1} parent=1 // pred_check_branch
      %39 = sbr.rel (0) target = $region21
    $region20: #{tpu_custom_call.1} parent=1 // pred_region
      %40 = dma.done [#allocation6], 2048
    $region21: #{tpu_custom_call.1} parent=1 // pred_fallthru
      _
    %v41 = vld [vmem:[#allocation2] sm:$0xff]
    %v42 = vld [vmem:[#allocation5] sm:$0xff]
    %v43 = vld [vmem:[#allocation5 + $0x8] sm:$0xff]
    %v44 = vld [vmem:[#allocation5 + $0x10] sm:$0xff]
    %v45 = vld [vmem:[#allocation5 + $0x18] sm:$0xff]
    %v46 = vld [vmem:[#allocation5 + $0x20] sm:$0xff]
    %v47 = vld [vmem:[#allocation5 + $0x28] sm:$0xff]
    %v48 = vld [vmem:[#allocation5 + $0x30] sm:$0xff]
    %v49 = vld [vmem:[#allocation5 + $0x38] sm:$0xff]
    %v50 = vld [vmem:[#allocation5 + $0x40] sm:$0xff]
    %v51 = vld [vmem:[#allocation5 + $0x48] sm:$0xff]
    %v52 = vld [vmem:[#allocation5 + $0x50] sm:$0xff]
    %v53 = vld [vmem:[#allocation5 + $0x58] sm:$0xff]
    %v54 = vld [vmem:[#allocation5 + $0x60] sm:$0xff]
    %v55 = vld [vmem:[#allocation5 + $0x68] sm:$0xff]
    %v56 = vld [vmem:[#allocation5 + $0x70] sm:$0xff]
    %v57 = vld [vmem:[#allocation5 + $0x78] sm:$0xff]
    %v58 = vld [vmem:[%s2] sm:$0x1]
    %v60 = vlaneseq
    %v61 = vshrl.u32 %v60, 7
    %v62 = vsub.s32 0, %v61
    %v63 = vrot.slane %v58, %v62
    %65 = vmatprep.subr.mxu0 0.0
    %66 = vmatpush1.msra.mxu0 %v42
    %67 = vmatprep.subr.mxu0 0.0
    %68 = vmatpush1.msra.mxu0 %v43
    %69 = vmatprep.subr.mxu0 0.0
    %70 = vmatpush1.msra.mxu0 %v44
    %71 = vmatprep.subr.mxu0 0.0
    %72 = vmatpush1.msra.mxu0 %v45
    %73 = vmatprep.subr.mxu0 0.0
    %74 = vmatpush1.msra.mxu0 %v46
    %75 = vmatprep.subr.mxu0 0.0
    %76 = vmatpush1.msra.mxu0 %v47
    %77 = vmatprep.subr.mxu0 0.0
    %78 = vmatpush1.msra.mxu0 %v48
    %79 = vmatprep.subr.mxu0 0.0
    %80 = vmatpush1.msra.mxu0 %v49
    %81 = vmatprep.subr.mxu0 0.0
    %82 = vmatpush1.msra.mxu0 %v50
    %83 = vmatprep.subr.mxu0 0.0
    %84 = vmatpush1.msra.mxu0 %v51
    %85 = vmatprep.subr.mxu0 0.0
    %86 = vmatpush1.msra.mxu0 %v52
    %87 = vmatprep.subr.mxu0 0.0
    %88 = vmatpush1.msra.mxu0 %v53
    %89 = vmatprep.subr.mxu0 0.0
    %90 = vmatpush1.msra.mxu0 %v54
    %91 = vmatprep.subr.mxu0 0.0
    %92 = vmatpush1.msra.mxu0 %v55
    %93 = vmatprep.subr.mxu0 0.0
    %94 = vmatpush1.msra.mxu0 %v56
    %95 = vmatprep.subr.mxu0 0.0
    %96 = vmatpush1.msra.mxu0 %v57
    %97 = vmatprep.subr.mxu0 0.0
    %98 = vmatpush1.msra.mxu0 0.0
    %99 = vmatprep.subr.mxu0 0.0
    %100 = vmatpush1.msra.mxu0 0.0
    %101 = vmatprep.subr.mxu0 0.0
    %102 = vmatpush1.msra.mxu0 0.0
    %103 = vmatprep.subr.mxu0 0.0
    %104 = vmatpush1.msra.mxu0 0.0
    %105 = vmatprep.subr.mxu0 0.0
    %106 = vmatpush1.msra.mxu0 0.0
    %107 = vmatprep.subr.mxu0 0.0
    %108 = vmatpush1.msra.mxu0 0.0
    %109 = vmatprep.subr.mxu0 0.0
    %110 = vmatpush1.msra.mxu0 0.0
    %111 = vmatprep.subr.mxu0 0.0
    %112 = vmatpush1.msra.mxu0 0.0
    %113 = vmatprep.subr.mxu0 0.0
    %114 = vmatpush1.msra.mxu0 0.0
    %115 = vmatprep.subr.mxu0 0.0
    %116 = vmatpush1.msra.mxu0 0.0
    %117 = vmatprep.subr.mxu0 0.0
    %118 = vmatpush1.msra.mxu0 0.0
    %119 = vmatprep.subr.mxu0 0.0
    %120 = vmatpush1.msra.mxu0 0.0
    %121 = vmatprep.subr.mxu0 0.0
    %122 = vmatpush1.msra.mxu0 0.0
    %123 = vmatprep.subr.mxu0 0.0
    %124 = vmatpush1.msra.mxu0 0.0
    %125 = vmatprep.subr.mxu0 0.0
    %126 = vmatpush1.msra.mxu0 0.0
    %127 = vmatprep.subr.mxu0 0.0
    %128 = vmatpush1.msra.mxu0 0.0
    %129 = vmatprep.mubr.f32.mxu0 0.0
    %130 = vmatmul.mubr.f32.gmra.mrb[0].mxu0 %v41
    %v131 = vpop.f32.mrb[0].mxu0
    %v132 = vadd.f32 %v63, %v131
    %v133 = vpop.f32.mrb[0].mxu0
    %134 = vdwg.mxu0
    %v135 = vxor.u32 %v132, 2147483648
    %v136 = vmul.f32 %v135, 1.442695
    %v137 = vpow.pop %v136
    %v138 = vadd.f32 %v137, 1.0
    %v139 = vrcp.pop %v138
    %v140 = vmul.f32 1.0, %v139
    %141 = vst [vmem:[#allocation7] sm:$0xff] %v140
    // Predicated region
    $region22: #{tpu_custom_call.1} parent=1 // pred_check
      _
    $region23: #{tpu_custom_call.1} parent=1 // pred_check_branch
      %143 = sbr.rel (0) target = $region25
    $region24: #{tpu_custom_call.1} parent=1 // pred_region
      %s145 = ssub.s32 128, 128
      %146 = vsyncadd [#allocation4], %s145
      %s148 = sshll.u32 [#allocation7], 4
      %s149 = int_to_ptr.vmem [resolvable:$true] %s148
      %151 = dma.vmem_to_hbm [thread:$0]  %s149, 128, %s3, [#allocation4]
    $region25: #{tpu_custom_call.1} parent=1 // pred_fallthru
      _
    // Predicated region
    $region26: #{tpu_custom_call.1} parent=1 // pred_check
      _
    $region27: #{tpu_custom_call.1} parent=1 // pred_check_branch
      %153 = sbr.rel (0) target = $region29
    $region28: #{tpu_custom_call.1} parent=1 // pred_region
      %154 = dma.done [#allocation4], 128
    $region29: #{tpu_custom_call.1} parent=1 // pred_fallthru
      _
    %155 = vsyncpa [#allocation3], 1
    %156 = vsyncpa [#allocation6], 1
    %157 = vsyncpa [#allocation4], 1

</llo_original>
